<compile_context>
chip_gen: v7x
topology: tpu7x:2x2x1
jax: 0.10.0
libtpu: 0.0.40
codegen_flags: <defaults>
</compile_context>

<pallas_src>
import functools

import jax
import jax.numpy as jnp
import numpy as np
from jax.experimental import pallas as pl
from jax.experimental.pallas import tpu as pltpu


def _round_up(x, m):
    return (x + m - 1) // m * m


def _embedding_loss_kernel(ab_ref, ys_ref, sign_ref, wt_ref, loss_ref, *, tb):
    """One grid tile: TB pairs -> per-row losses, lane-dense [1, TB]."""
    # ---- fused gather: one one-hot bf16 MXU matmul for both pair sides ----
    idx = ab_ref[...]                                          # [1, 2*TB] int32
    s_pad = wt_ref.shape[1]
    iota = jax.lax.broadcasted_iota(jnp.int32, (s_pad, 2 * tb), 0)
    onehot_t = (iota == idx).astype(jnp.bfloat16)              # [S_pad, 2*TB]
    emb_t = jnp.dot(wt_ref[...], onehot_t,                     # [D_pad, 2*TB] f32
                    preferred_element_type=jnp.float32)
    a_emb = emb_t[:, :tb]                                      # [D_pad, TB]
    b_emb = emb_t[:, tb:]                                      # [D_pad, TB]

    # ---- pairwise dot (sublane/XLU reduce -> lane-dense row) + loss --------
    d = jnp.sum(a_emb * b_emb, axis=0, keepdims=True)          # [1, TB]
    ys = ys_ref[...]                                           # [1, TB] f32
    sign = sign_ref[...]                                       # [1, TB] f32
    valid = (sign != 0.0).astype(jnp.float32)                  # 0 on padded rows
    alpha = jnp.log(ys * ys + 1.0) + 1.0
    coef = jnp.where(sign > 0.0, alpha, 1.0) * valid
    x = sign * d
    # stable log(sigmoid(x)) = min(x, 0) - log1p(exp(-|x|))   (EUP ops, f32)
    log_sig = jnp.minimum(x, 0.0) - jnp.log1p(jnp.exp(-jnp.abs(x)))
    loss_ref[...] = -coef * log_sig                            # [1, TB] lane-dense


def embedding_model_forward(pos_idxs, ys, neg_idxs, weight, num_neg=10,
                            max_tile_rows=512):
    """Pallas equivalent of EmbeddingModel.forward.

    pos_idxs: int [2, B_pos], ys: f32 [B_pos], neg_idxs: int [2, B_neg],
    weight: f32 [num_species, num_vector].  Returns scalar f32 loss.
    """
    B_pos = pos_idxs.shape[1]
    B_neg = neg_idxs.shape[1]
    denom = float(B_pos * (1 + num_neg))

    S, D = weight.shape
    # Transposed weight layout: W^T is [D_pad (sublane), S_pad (lane)].
    S_pad = _round_up(S, 128)          # lane-dense species axis
    D_pad = _round_up(D, 8)            # sublane-aligned embedding axis

    # --- unified pair rows: positives first, then negatives ---
    B_pair = B_pos + B_neg
    TB = min(_round_up(B_pair, 128), _round_up(max_tile_rows, 128))
    n_tiles = pl.cdiv(B_pair, TB)
    B_pad = TB * n_tiles
    pad = B_pad - B_pair

    a = jnp.concatenate([pos_idxs[0], neg_idxs[0]]).astype(jnp.int32)
    b = jnp.concatenate([pos_idxs[1], neg_idxs[1]]).astype(jnp.int32)
    a = jnp.pad(a, (0, pad))
    b = jnp.pad(b, (0, pad))
    # Pack per tile as [a rows (TB); b rows (TB)] so one matmul gathers both.
    ab = jnp.concatenate(
        [a.reshape(n_tiles, TB), b.reshape(n_tiles, TB)], axis=1
    ).reshape(1, n_tiles * 2 * TB)

    ys_all = jnp.pad(ys.astype(jnp.float32), (0, B_pad - B_pos)).reshape(1, B_pad)
    sign = jnp.concatenate([
        jnp.ones((B_pos,), jnp.float32),
        -jnp.ones((B_neg,), jnp.float32),
        jnp.zeros((pad,), jnp.float32),
    ]).reshape(1, B_pad)

    # bf16 transposed weights (MXU fast path), zero-padded to (D_pad, S_pad).
    wt = jnp.zeros((D_pad, S_pad), jnp.bfloat16)
    wt = wt.at[:D, :S].set(weight.T.astype(jnp.bfloat16))

    # --- VMEM budget estimate (table + per-tile activations, 2x buffers) ---
    vmem_bytes = (
        2 * S_pad * D_pad * 2                      # W^T (bf16), double-buffered
        + 2 * (2 * TB + TB + TB + TB) * 4          # ab / ys / sign / out blocks
        + 2 * TB * S_pad * (4 + 2)                 # iota (i32) + one-hot (bf16)
        + 2 * (2 * TB) * D_pad * 4                 # gathered embeddings (f32)
    )
    vmem_limit = int(min(max(2 * vmem_bytes, 16 * 1024 * 1024),
                         64 * 1024 * 1024))

    cost = pl.CostEstimate(
        flops=int(2 * D_pad * S_pad * (2 * TB) * n_tiles + 8 * B_pad * D_pad),
        transcendentals=int(3 * B_pad),
        bytes_accessed=int(S_pad * D_pad * 2 + B_pad * (2 * 4 + 4 + 4 + 4)),
    )

    kernel = functools.partial(_embedding_loss_kernel, tb=TB)
    per_row_loss = pl.pallas_call(
        kernel,
        out_shape=jax.ShapeDtypeStruct((1, B_pad), jnp.float32),
        grid_spec=pltpu.PrefetchScalarGridSpec(
            num_scalar_prefetch=0,
            grid=(n_tiles,),
            in_specs=[
                pl.BlockSpec((1, 2 * TB), lambda i: (0, i)),      # packed idx
                pl.BlockSpec((1, TB), lambda i: (0, i)),          # ys
                pl.BlockSpec((1, TB), lambda i: (0, i)),          # sign
                pl.BlockSpec((D_pad, S_pad), lambda i: (0, 0)),   # W^T (resident)
            ],
            out_specs=pl.BlockSpec((1, TB), lambda i: (0, i)),
        ),
        compiler_params=pltpu.CompilerParams(
            dimension_semantics=("parallel",),
            vmem_limit_bytes=vmem_limit,
        ),
        cost_estimate=cost,
    )(ab, ys_all, sign, wt)

    # Tiny final reduction (<= a few hundred floats) outside the kernel so the
    # batch grid axis stays race-free under megacore sharding.
    return jnp.sum(per_row_loss) / denom


def _reference_forward(pos_idxs, ys, neg_idxs, weight, num_neg=10):
    # Pure-JAX (f32) reference mirroring the PyTorch module.
    u = weight[pos_idxs[0]]
    v = weight[pos_idxs[1]]
    alpha = jnp.log(ys ** 2 + 1.0) + 1.0
    positive_loss = -alpha * jax.nn.log_sigmoid(jnp.sum(u * v, axis=1))
    nu = weight[neg_idxs[0]]
    nv = weight[neg_idxs[1]]
    negative_loss = -jax.nn.log_sigmoid(-jnp.sum(nu * nv, axis=1))
    return (jnp.sum(positive_loss) + jnp.sum(negative_loss)) / (
        pos_idxs.shape[1] * (1 + num_neg))


if __name__ == "__main__":
    num_species = 32
    num_vector = 32
    B_pos = 8
    num_neg = 10
    B_neg = B_pos * num_neg

    key = jax.random.PRNGKey(0)
    k_w, k_pos, k_ys, k_neg = jax.random.split(key, 4)

    # Deterministic xavier-uniform-style init for the embedding table.
    bound = float(np.sqrt(6.0 / (num_species + num_vector)))
    weight = jax.random.uniform(
        k_w, (num_species, num_vector), jnp.float32, -bound, bound)

    pos_idxs = jax.random.randint(k_pos, (2, B_pos), 0, num_species, jnp.int32)
    ys = jax.random.uniform(k_ys, (B_pos,), jnp.float32, 0.0, 5.0)
    neg_idxs = jax.random.randint(k_neg, (2, B_neg), 0, num_species, jnp.int32)

    loss = embedding_model_forward(pos_idxs, ys, neg_idxs, weight, num_neg)
    loss = jax.block_until_ready(loss)

    ref = _reference_forward(pos_idxs, ys, neg_idxs, weight, num_neg)
    # Tolerance relaxed vs f32 reference because the embedding table is fed to
    # the MXU in bf16; bf16 rounding of W is the only source of error.
    assert np.allclose(np.asarray(loss), np.asarray(ref), rtol=2e-2, atol=2e-2), (
        loss, ref)

    print("KERNEL_OK")
</pallas_src>

<mosaic_0001>
module attributes {stable_mosaic.version = 11 : i64} {
  func.func @_embedding_loss_kernel(%arg0: i32, %arg1: memref<1x256xi32, #tpu.memory_space<vmem>>, %arg2: memref<1x128xf32, #tpu.memory_space<vmem>>, %arg3: memref<1x128xf32, #tpu.memory_space<vmem>>, %arg4: memref<32x128xbf16, #tpu.memory_space<vmem>>, %arg5: memref<1x128xf32, #tpu.memory_space<vmem>>) attributes {dimension_semantics = [#tpu.dimension_semantics<parallel>], iteration_bounds = array<i64: 1>, scalar_prefetch = 0 : i64, scratch_operands = 0 : i64, tpu.core_type = #tpu.core_type<tc>, window_params = [{transform_indices = @transform_0, window_bounds = array<i64: 1, 256>}, {transform_indices = @transform_1, window_bounds = array<i64: 1, 128>}, {transform_indices = @transform_2, window_bounds = array<i64: 1, 128>}, {pipeline_mode = #tpu.pipeline_mode<synchronous>, transform_indices = @transform_3, window_bounds = array<i64: 32, 128>}, {transform_indices = @transform_4, window_bounds = array<i64: 1, 128>}]} {
    %c0 = arith.constant 0 : index
    %c0_0 = arith.constant 0 : index
    %0 = vector.load %arg1[%c0, %c0_0] : memref<1x256xi32, #tpu.memory_space<vmem>>, vector<1x256xi32>
    %1 = tpu.iota {dimensions = array<i32: 0>} : vector<128x256xi32>
    %2 = vector.broadcast %0 : vector<1x256xi32> to vector<128x256xi32>
    %3 = arith.cmpi eq, %1, %2 : vector<128x256xi32>
    %4 = arith.extui %3 : vector<128x256xi1> to vector<128x256xi32>
    %5 = arith.sitofp %4 : vector<128x256xi32> to vector<128x256xf32>
    %6 = arith.truncf %5 : vector<128x256xf32> to vector<128x256xbf16>
    %c0_1 = arith.constant 0 : index
    %c0_2 = arith.constant 0 : index
    %7 = vector.load %arg4[%c0_1, %c0_2] : memref<32x128xbf16, #tpu.memory_space<vmem>>, vector<32x128xbf16>
    %cst = arith.constant dense<0.000000e+00> : vector<32x256xf32>
    %8 = tpu.matmul %7, %6, %cst {dimension_numbers = #tpu.dot_dimension_numbers<[1], [0], [0], [1], [0, 0, 1, 1], [], []>} : vector<32x128xbf16>, vector<128x256xbf16>, vector<32x256xf32> -> vector<32x256xf32>
    %9 = vector.extract_strided_slice %8 {offsets = [0, 0], sizes = [32, 128], strides = [1, 1]} : vector<32x256xf32> to vector<32x128xf32>
    %10 = vector.extract_strided_slice %8 {offsets = [0, 128], sizes = [32, 128], strides = [1, 1]} : vector<32x256xf32> to vector<32x128xf32>
    %11 = arith.mulf %9, %10 : vector<32x128xf32>
    %cst_3 = arith.constant dense<0.000000e+00> : vector<128xf32>
    %12 = vector.multi_reduction <add>, %11, %cst_3 [0] : vector<32x128xf32> to vector<128xf32>
    %13 = vector.shape_cast %12 : vector<128xf32> to vector<1x128xf32>
    %c0_4 = arith.constant 0 : index
    %c0_5 = arith.constant 0 : index
    %14 = vector.load %arg2[%c0_4, %c0_5] : memref<1x128xf32, #tpu.memory_space<vmem>>, vector<1x128xf32>
    %c0_6 = arith.constant 0 : index
    %c0_7 = arith.constant 0 : index
    %15 = vector.load %arg3[%c0_6, %c0_7] : memref<1x128xf32, #tpu.memory_space<vmem>>, vector<1x128xf32>
    %cst_8 = arith.constant 0.000000e+00 : f32
    %16 = vector.broadcast %cst_8 : f32 to vector<1x128xf32>
    %17 = arith.cmpf one, %15, %16 : vector<1x128xf32>
    %18 = arith.extui %17 : vector<1x128xi1> to vector<1x128xi32>
    %19 = arith.sitofp %18 : vector<1x128xi32> to vector<1x128xf32>
    %20 = arith.mulf %14, %14 : vector<1x128xf32>
    %cst_9 = arith.constant 1.000000e+00 : f32
    %21 = vector.broadcast %cst_9 : f32 to vector<1x128xf32>
    %22 = arith.addf %20, %21 : vector<1x128xf32>
    %23 = math.log %22 : vector<1x128xf32>
    %cst_10 = arith.constant 1.000000e+00 : f32
    %24 = vector.broadcast %cst_10 : f32 to vector<1x128xf32>
    %25 = arith.addf %23, %24 : vector<1x128xf32>
    %cst_11 = arith.constant 0.000000e+00 : f32
    %26 = vector.broadcast %cst_11 : f32 to vector<1x128xf32>
    %27 = arith.cmpf ogt, %15, %26 : vector<1x128xf32>
    %cst_12 = arith.constant 1.000000e+00 : f32
    %28 = vector.broadcast %cst_12 : f32 to vector<1x128xf32>
    %29 = arith.select %27, %25, %28 : vector<1x128xi1>, vector<1x128xf32>
    %30 = arith.mulf %29, %19 : vector<1x128xf32>
    %31 = arith.mulf %15, %13 : vector<1x128xf32>
    %cst_13 = arith.constant 0.000000e+00 : f32
    %32 = vector.broadcast %cst_13 : f32 to vector<1x128xf32>
    %33 = arith.minimumf %31, %32 : vector<1x128xf32>
    %34 = math.absf %31 : vector<1x128xf32>
    %cst_14 = arith.constant 0.000000e+00 : f32
    %35 = vector.broadcast %cst_14 : f32 to vector<1x128xf32>
    %36 = arith.subf %35, %34 : vector<1x128xf32>
    %37 = math.exp %36 : vector<1x128xf32>
    %38 = math.log1p %37 : vector<1x128xf32>
    %39 = arith.subf %33, %38 : vector<1x128xf32>
    %cst_15 = arith.constant 0.000000e+00 : f32
    %40 = vector.broadcast %cst_15 : f32 to vector<1x128xf32>
    %41 = arith.subf %40, %30 : vector<1x128xf32>
    %42 = arith.mulf %41, %39 : vector<1x128xf32>
    %c0_16 = arith.constant 0 : index
    %c0_17 = arith.constant 0 : index
    %43 = vector.load %arg5[%c0_16, %c0_17] : memref<1x128xf32, #tpu.memory_space<vmem>>, vector<1x128xf32>
    tpu.vector_store %arg5[%c0_16, %c0_17], %42 {strides = array<i32>} : memref<1x128xf32, #tpu.memory_space<vmem>>, vector<1x128xf32>,
    return
  }
  func.func @transform_0(%arg0: i32) -> (i32, i32) {
    %c0_i32 = arith.constant 0 : i32
    %c0_i32_0 = arith.constant 0 : i32
    return %c0_i32, %arg0 : i32, i32
  }
  func.func @transform_1(%arg0: i32) -> (i32, i32) {
    %c0_i32 = arith.constant 0 : i32
    %c0_i32_0 = arith.constant 0 : i32
    return %c0_i32, %arg0 : i32, i32
  }
  func.func @transform_2(%arg0: i32) -> (i32, i32) {
    %c0_i32 = arith.constant 0 : i32
    %c0_i32_0 = arith.constant 0 : i32
    return %c0_i32, %arg0 : i32, i32
  }
  func.func @transform_3(%arg0: i32) -> (i32, i32) {
    %c0_i32 = arith.constant 0 : i32
    %c0_i32_0 = arith.constant 0 : i32
    %c0_i32_1 = arith.constant 0 : i32
    return %c0_i32, %c0_i32_0 : i32, i32
  }
  func.func @transform_4(%arg0: i32) -> (i32, i32) {
    %c0_i32 = arith.constant 0 : i32
    %c0_i32_0 = arith.constant 0 : i32
    return %c0_i32, %arg0 : i32, i32
  }
}

</mosaic_0001>

<llo_original>
// kernel: tpu_custom_call.1
$region0: #{tpu_custom_call.1}
  #allocation0 [shape = 'u32[]', space=smem, size = 0x4, offset = 0x4, fixed_abs, tag = 'smem constant byte address 0x4 - core index']
  #allocation1 [shape = 'u32[144,128]{1,0:T(1,128)}', space=vmem, size = 0x12000, scoped, tag = 'internal scratch']
  %s0 = inlined_call_operand.hbm [shape: s32[1,256], index: 0, kind: input, shape index: {}]
  %s1 = inlined_call_operand.vmem [shape: f32[1,128], index: 1, kind: input, shape index: {}]
  %s2 = inlined_call_operand.vmem [shape: f32[1,128], index: 2, kind: input, shape index: {}]
  %s3 = inlined_call_operand.hbm [shape: bf16[32,128], index: 3, kind: input, shape index: {}]
  %s4 = inlined_call_operand.hbm [shape: f32[1,128], index: 4, kind: output, shape index: {}]
  %s5 = sld [smem:[#allocation0]]
  $region34: #{tpu_custom_call.1} parent=0
    _
  %s7 = ssub.s32 1, %s5
  %s8 = scalar_select 0, %s7, %s5
  $region1: #{tpu_custom_call.1} parent=0
    #allocation2 [shape = 'u8[1024]{0}', space=vmem, size = 0x400, scoped, tag = 'input window, operand 0, single buffered']
    #allocation3 [shape = 's32[1]{0}', space=sflag, size = 0x4, scoped, tag = 'scoped memory for tpu_custom_call.1']
    #allocation4 [shape = 's32[1]{0}', space=sflag, size = 0x4, scoped, tag = 'scoped memory for tpu_custom_call.1']
    #allocation5 [shape = 'u8[8192]{0}', space=vmem, size = 0x2000, scoped, tag = 'input window, operand 3, single buffered']
    #allocation6 [shape = 's32[1]{0}', space=sflag, size = 0x4, scoped, tag = 'scoped memory for tpu_custom_call.1']
    #allocation7 [shape = 'u8[512]{0}', space=vmem, size = 0x400, scoped, tag = 'output window, operand 0, single buffered']
    %9 = vsyncpa [#allocation3], 0
    %10 = vsyncpa [#allocation6], 0
    %11 = vsyncpa [#allocation4], 0
    // Predicated region
    $region2: #{tpu_custom_call.1} parent=1 // pred_check
      _
    $region3: #{tpu_custom_call.1} parent=1 // pred_check_branch
      %13 = sbr.rel (0) target = $region5
    $region4: #{tpu_custom_call.1} parent=1 // pred_region
      %s15 = ssub.s32 32, 32
      %16 = vsyncadd [#allocation3], %s15
      %s18 = sshll.u32 [#allocation2], 4
      %s19 = int_to_ptr.vmem [resolvable:$true] %s18
      %21 = dma.hbm_to_vmem [thread:$0]  %s0, 32, %s19, [#allocation3]
    $region5: #{tpu_custom_call.1} parent=1 // pred_fallthru
      _
    // Predicated region
    $region6: #{tpu_custom_call.1} parent=1 // pred_check
      _
    $region7: #{tpu_custom_call.1} parent=1 // pred_check_branch
      %23 = sbr.rel (0) target = $region9
    $region8: #{tpu_custom_call.1} parent=1 // pred_region
      _
    $region9: #{tpu_custom_call.1} parent=1 // pred_fallthru
      _
    // Predicated region
    $region10: #{tpu_custom_call.1} parent=1 // pred_check
      _
    $region11: #{tpu_custom_call.1} parent=1 // pred_check_branch
      %25 = sbr.rel (0) target = $region13
    $region12: #{tpu_custom_call.1} parent=1 // pred_region
      _
    $region13: #{tpu_custom_call.1} parent=1 // pred_fallthru
      _
    // Predicated region
    $region14: #{tpu_custom_call.1} parent=1 // pred_check
      _
    $region15: #{tpu_custom_call.1} parent=1 // pred_check_branch
      %27 = sbr.rel (0) target = $region17
    $region16: #{tpu_custom_call.1} parent=1 // pred_region
      %s29 = ssub.s32 256, 256
      %30 = vsyncadd [#allocation6], %s29
      %s31 = sshll.u32 [#allocation5], 4
      %s32 = int_to_ptr.vmem [resolvable:$true] %s31
      %37 = dma.hbm_to_vmem [thread:$0]  %s3, 256, %s32, [#allocation6], 64, 64, 4
    $region17: #{tpu_custom_call.1} parent=1 // pred_fallthru
      _
    // Predicated region
    $region18: #{tpu_custom_call.1} parent=1 // pred_check
      _
    $region19: #{tpu_custom_call.1} parent=1 // pred_check_branch
      %39 = sbr.rel (0) target = $region21
    $region20: #{tpu_custom_call.1} parent=1 // pred_region
      %40 = dma.done [#allocation3], 32
    $region21: #{tpu_custom_call.1} parent=1 // pred_fallthru
      _
    // Predicated region
    $region22: #{tpu_custom_call.1} parent=1 // pred_check
      _
    $region23: #{tpu_custom_call.1} parent=1 // pred_check_branch
      %42 = sbr.rel (0) target = $region25
    $region24: #{tpu_custom_call.1} parent=1 // pred_region
      %43 = dma.done [#allocation6], 256
    $region25: #{tpu_custom_call.1} parent=1 // pred_fallthru
      _
    %v45 = vld [vmem:[#allocation2] sm:$0x3]
    %v46 = vlaneseq
    %v47 = vshrl.u32 %v46, 7
    %v48 = vadd.s32 %v47, 8
    %v49 = vadd.s32 %v47, 16
    %v50 = vadd.s32 %v47, 24
    %v51 = vadd.s32 %v47, 32
    %v52 = vadd.s32 %v47, 40
    %v53 = vadd.s32 %v47, 48
    %v54 = vadd.s32 %v47, 56
    %v55 = vadd.s32 %v47, 64
    %v56 = vadd.s32 %v47, 72
    %v57 = vadd.s32 %v47, 80
    %v58 = vadd.s32 %v47, 88
    %v59 = vadd.s32 %v47, 96
    %v60 = vadd.s32 %v47, 104
    %v61 = vadd.s32 %v47, 112
    %v62 = vadd.s32 %v47, 120
    %v63 = vlaneseq
    %v64 = vshrl.u32 %v63, 7
    %v65 = vsub.s32 0, %v64
    %v66 = vrot.slane %v45, %v65
    %v67 = vlaneseq
    %v68 = vshrl.u32 %v67, 7
    %v69 = vsub.s32 1, %v68
    %v70 = vrot.slane %v45, %v69
    %vm71 = vcmp.eq.s32.totalorder %v47, %v66
    %vm72 = vcmp.eq.s32.totalorder %v47, %v70
    %vm73 = vcmp.eq.s32.totalorder %v48, %v66
    %vm74 = vcmp.eq.s32.totalorder %v48, %v70
    %vm75 = vcmp.eq.s32.totalorder %v49, %v66
    %vm76 = vcmp.eq.s32.totalorder %v49, %v70
    %vm77 = vcmp.eq.s32.totalorder %v50, %v66
    %vm78 = vcmp.eq.s32.totalorder %v50, %v70
    %vm79 = vcmp.eq.s32.totalorder %v51, %v66
    %vm80 = vcmp.eq.s32.totalorder %v51, %v70
    %vm81 = vcmp.eq.s32.totalorder %v52, %v66
    %vm82 = vcmp.eq.s32.totalorder %v52, %v70
    %vm83 = vcmp.eq.s32.totalorder %v53, %v66
    %vm84 = vcmp.eq.s32.totalorder %v53, %v70
    %vm85 = vcmp.eq.s32.totalorder %v54, %v66
    %vm86 = vcmp.eq.s32.totalorder %v54, %v70
    %vm87 = vcmp.eq.s32.totalorder %v55, %v66
    %vm88 = vcmp.eq.s32.totalorder %v55, %v70
    %vm89 = vcmp.eq.s32.totalorder %v56, %v66
    %vm90 = vcmp.eq.s32.totalorder %v56, %v70
    %vm91 = vcmp.eq.s32.totalorder %v57, %v66
    %vm92 = vcmp.eq.s32.totalorder %v57, %v70
    %vm93 = vcmp.eq.s32.totalorder %v58, %v66
    %vm94 = vcmp.eq.s32.totalorder %v58, %v70
    %vm95 = vcmp.eq.s32.totalorder %v59, %v66
    %vm96 = vcmp.eq.s32.totalorder %v59, %v70
    %vm97 = vcmp.eq.s32.totalorder %v60, %v66
    %vm98 = vcmp.eq.s32.totalorder %v60, %v70
    %vm99 = vcmp.eq.s32.totalorder %v61, %v66
    %vm100 = vcmp.eq.s32.totalorder %v61, %v70
    %vm101 = vcmp.eq.s32.totalorder %v62, %v66
    %vm102 = vcmp.eq.s32.totalorder %v62, %v70
    %v103 = vsel %vm71, 1, 0
    %v104 = vsel %vm72, 1, 0
    %v105 = vsel %vm73, 1, 0
    %v106 = vsel %vm74, 1, 0
    %v107 = vsel %vm75, 1, 0
    %v108 = vsel %vm76, 1, 0
    %v109 = vsel %vm77, 1, 0
    %v110 = vsel %vm78, 1, 0
    %v111 = vsel %vm79, 1, 0
    %v112 = vsel %vm80, 1, 0
    %v113 = vsel %vm81, 1, 0
    %v114 = vsel %vm82, 1, 0
    %v115 = vsel %vm83, 1, 0
    %v116 = vsel %vm84, 1, 0
    %v117 = vsel %vm85, 1, 0
    %v118 = vsel %vm86, 1, 0
    %v119 = vsel %vm87, 1, 0
    %v120 = vsel %vm88, 1, 0
    %v121 = vsel %vm89, 1, 0
    %v122 = vsel %vm90, 1, 0
    %v123 = vsel %vm91, 1, 0
    %v124 = vsel %vm92, 1, 0
    %v125 = vsel %vm93, 1, 0
    %v126 = vsel %vm94, 1, 0
    %v127 = vsel %vm95, 1, 0
    %v128 = vsel %vm96, 1, 0
    %v129 = vsel %vm97, 1, 0
    %v130 = vsel %vm98, 1, 0
    %v131 = vsel %vm99, 1, 0
    %v132 = vsel %vm100, 1, 0
    %v133 = vsel %vm101, 1, 0
    %v134 = vsel %vm102, 1, 0
    %v135 = vcvt.s32.f32 %v103
    %v136 = vcvt.s32.f32 %v104
    %v137 = vcvt.s32.f32 %v105
    %v138 = vcvt.s32.f32 %v106
    %v139 = vcvt.s32.f32 %v107
    %v140 = vcvt.s32.f32 %v108
    %v141 = vcvt.s32.f32 %v109
    %v142 = vcvt.s32.f32 %v110
    %v143 = vcvt.s32.f32 %v111
    %v144 = vcvt.s32.f32 %v112
    %v145 = vcvt.s32.f32 %v113
    %v146 = vcvt.s32.f32 %v114
    %v147 = vcvt.s32.f32 %v115
    %v148 = vcvt.s32.f32 %v116
    %v149 = vcvt.s32.f32 %v117
    %v150 = vcvt.s32.f32 %v118
    %v151 = vcvt.s32.f32 %v119
    %v152 = vcvt.s32.f32 %v120
    %v153 = vcvt.s32.f32 %v121
    %v154 = vcvt.s32.f32 %v122
    %v155 = vcvt.s32.f32 %v123
    %v156 = vcvt.s32.f32 %v124
    %v157 = vcvt.s32.f32 %v125
    %v158 = vcvt.s32.f32 %v126
    %v159 = vcvt.s32.f32 %v127
    %v160 = vcvt.s32.f32 %v128
    %v161 = vcvt.s32.f32 %v129
    %v162 = vcvt.s32.f32 %v130
    %v163 = vcvt.s32.f32 %v131
    %v164 = vcvt.s32.f32 %v132
    %v165 = vcvt.s32.f32 %v133
    %v166 = vcvt.s32.f32 %v134
    %v167 = vpack.c.bf16 %v137, %v135
    %v168 = vpack.c.bf16 %v138, %v136
    %v169 = vpack.c.bf16 %v141, %v139
    %v170 = vpack.c.bf16 %v142, %v140
    %v171 = vpack.c.bf16 %v145, %v143
    %v172 = vpack.c.bf16 %v146, %v144
    %v173 = vpack.c.bf16 %v149, %v147
    %v174 = vpack.c.bf16 %v150, %v148
    %v175 = vpack.c.bf16 %v153, %v151
    %v176 = vpack.c.bf16 %v154, %v152
    %v177 = vpack.c.bf16 %v157, %v155
    %v178 = vpack.c.bf16 %v158, %v156
    %v179 = vpack.c.bf16 %v161, %v159
    %v180 = vpack.c.bf16 %v162, %v160
    %v181 = vpack.c.bf16 %v165, %v163
    %v182 = vpack.c.bf16 %v166, %v164
    %v183 = vld [vmem:[#allocation5] sm:$0xf]
    %v184 = vld [vmem:[#allocation5 + $0x4] sm:$0xf]
    %v185 = vld [vmem:[#allocation5 + $0x8] sm:$0xf]
    %v186 = vld [vmem:[#allocation5 + $0xc] sm:$0xf]
    %v191 = vunpack.c.l.b16 %v183
    %v192 = vunpack.c.l.b16 %v184
    %v193 = vunpack.c.l.b16 %v185
    %v194 = vunpack.c.l.b16 %v186
    %v195 = vpack.c.b16 %v192, %v191
    %v196 = vpack.c.b16 %v194, %v193
    %199 = vmatprep.subr.bf16.mxu0 %v168
    %200 = vmatpush1.bf16.msra.mxu0 %v167
    %201 = vmatprep.subr.bf16.mxu0 %v170
    %202 = vmatpush1.bf16.msra.mxu0 %v169
    %203 = vmatprep.subr.bf16.mxu0 %v172
    %204 = vmatpush1.bf16.msra.mxu0 %v171
    %205 = vmatprep.subr.bf16.mxu0 %v174
    %206 = vmatpush1.bf16.msra.mxu0 %v173
    %207 = vmatprep.subr.bf16.mxu0 %v176
    %208 = vmatpush1.bf16.msra.mxu0 %v175
    %209 = vmatprep.subr.bf16.mxu0 %v178
    %210 = vmatpush1.bf16.msra.mxu0 %v177
    %211 = vmatprep.subr.bf16.mxu0 %v180
    %212 = vmatpush1.bf16.msra.mxu0 %v179
    %213 = vmatprep.subr.bf16.mxu0 %v182
    %214 = vmatpush1.bf16.msra.mxu0 %v181
    %215 = vmatprep.subr.bf16.mxu0 0
    %216 = vmatpush1.bf16.msra.mxu0 0
    %217 = vmatprep.subr.bf16.mxu0 0
    %218 = vmatpush1.bf16.msra.mxu0 0
    %219 = vmatprep.subr.bf16.mxu0 0
    %220 = vmatpush1.bf16.msra.mxu0 0
    %221 = vmatprep.subr.bf16.mxu0 0
    %222 = vmatpush1.bf16.msra.mxu0 0
    %223 = vmatprep.subr.bf16.mxu0 0
    %224 = vmatpush1.bf16.msra.mxu0 0
    %225 = vmatprep.subr.bf16.mxu0 0
    %226 = vmatpush1.bf16.msra.mxu0 0
    %227 = vmatprep.subr.bf16.mxu0 0
    %228 = vmatpush1.bf16.msra.mxu0 0
    %229 = vmatprep.subr.bf16.mxu0 0
    %230 = vmatpush1.bf16.msra.mxu0 0
    %231 = vmatprep.mubr.bf16.mxu0 0
    %232 = vmatmul.mubr.bf16.gmra.mrb[0].mxu0 %v195
    %v233 = vpop.f32.mrb[0].mxu0
    %v234 = vadd.f32 0.0, %v233
    %v235 = vpop.f32.mrb[0].mxu0
    %v236 = vadd.f32 0.0, %v235
    %v237 = vpop.f32.mrb[0].mxu0
    %v238 = vadd.f32 0.0, %v237
    %v239 = vpop.f32.mrb[0].mxu0
    %v240 = vadd.f32 0.0, %v239
    %241 = vmatprep.mubr.bf16.mxu0 0
    %242 = vmatmul.mubr.bf16.gmra.mrb[0].mxu0 %v196
    %v243 = vpop.f32.mrb[0].mxu0
    %v244 = vadd.f32 0.0, %v243
    %v245 = vpop.f32.mrb[0].mxu0
    %v246 = vadd.f32 0.0, %v245
    %v247 = vpop.f32.mrb[0].mxu0
    %v248 = vadd.f32 0.0, %v247
    %v249 = vpop.f32.mrb[0].mxu0
    %v250 = vadd.f32 0.0, %v249
    %251 = vdwg.mxu0
    %v252 = vmul.f32 %v234, %v236
    %v253 = vmul.f32 %v238, %v240
    %v254 = vmul.f32 %v244, %v246
    %v255 = vmul.f32 %v248, %v250
    %v256 = vadd.f32 %v252, %v253
    %v257 = vadd.f32 %v256, %v254
    %v258 = vadd.f32 %v257, %v255
    %v259 = vrot.slane %v258, 4
    %v260 = vadd.f32 %v258, %v259
    %v261 = vrot.slane %v260, 2
    %v262 = vadd.f32 %v260, %v261
    %v263 = vrot.slane %v262, 1
    %v264 = vadd.f32 %v262, %v263
    %v265 = vld [vmem:[%s1] sm:$0x1]
    %v266 = vld [vmem:[%s2] sm:$0x1]
    %vm267 = vcmp.ne.f32.partialorder %v266, 0.0
    %v268 = vsel %vm267, 1, 0
    %v269 = vcvt.s32.f32 %v268
    %v270 = vmul.f32 %v265, %v265
    %v271 = vadd.f32 %v270, 1.0
    %v272 = vlog2.pop %v271
    %v273 = vmul.f32 %v272, 0.6931472
    %v274 = vadd.f32 %v273, 1.0
    %vm275 = vcmp.gt.f32.partialorder %v266, 0.0
    %v276 = vsel %vm275, %v274, 1.0
    %v277 = vmul.f32 %v276, %v269
    %v278 = vmul.f32 %v266, %v264
    %v279 = vmin.f32 %v278, 0.0
    %v280 = vand.u32 2147483647, %v278
    %v281 = vsub.f32 0.0, %v280
    %v282 = vmul.f32 %v281, 1.442695
    %v283 = vpow.pop %v282
    %v284 = vadd.f32 %v283, 1.0
    %v285 = vlog2.pop %v284
    %v286 = vmul.f32 %v285, 0.6931472
    %v287 = vmul.f32 -0.5, %v283
    %v288 = vadd.f32 %v287, 1.0
    %v289 = vmul.f32 %v288, %v283
    %v290 = vand.u32 2147483647, %v283
    %vm291 = vcmp.lt.f32.partialorder %v290, 0.0004427343
    %v292 = vsel %vm291, %v289, %v286
    %v293 = vsub.f32 %v279, %v292
    %v294 = vsub.f32 0.0, %v277
    %v295 = vmul.f32 %v294, %v293
    %296 = vst [vmem:[#allocation7] sm:$0x1] %v295
    // Predicated region
    $region26: #{tpu_custom_call.1} parent=1 // pred_check
      _
    $region27: #{tpu_custom_call.1} parent=1 // pred_check_branch
      %298 = sbr.rel (0) target = $region29
    $region28: #{tpu_custom_call.1} parent=1 // pred_region
      %s300 = ssub.s32 16, 16
      %301 = vsyncadd [#allocation4], %s300
      %s303 = sshll.u32 [#allocation7], 4
      %s304 = int_to_ptr.vmem [resolvable:$true] %s303
      %306 = dma.vmem_to_hbm [thread:$0]  %s304, 16, %s4, [#allocation4]
    $region29: #{tpu_custom_call.1} parent=1 // pred_fallthru
      _
    // Predicated region
    $region30: #{tpu_custom_call.1} parent=1 // pred_check
      _
    $region31: #{tpu_custom_call.1} parent=1 // pred_check_branch
      %308 = sbr.rel (0) target = $region33
    $region32: #{tpu_custom_call.1} parent=1 // pred_region
      %309 = dma.done [#allocation4], 16
    $region33: #{tpu_custom_call.1} parent=1 // pred_fallthru
      _
    %310 = vsyncpa [#allocation3], 1
    %311 = vsyncpa [#allocation6], 1
    %312 = vsyncpa [#allocation4], 1

</llo_original>
